<compile_context>
chip_gen: v7x
topology: tpu7x:2x2x1
jax: 0.10.0
libtpu: 0.0.40
codegen_flags: <defaults>
</compile_context>

<pallas_src>
import jax
import jax.numpy as jnp
from jax.experimental import pallas as pl
from jax.experimental.pallas import tpu as pltpu

_LANES = 128


def mlp_kernel(params_ref, x_ref, w_ref, o_ref):
    # SMEM scalars: [b1_eff_0, b1_eff_1, 0.5*w2_0, 0.5*w2_1, 0.5*b2_0]
    b1_0 = params_ref[0]
    b1_1 = params_ref[1]
    v0 = params_ref[2]
    v1 = params_ref[3]
    c0 = params_ref[4]

    # x_ref block: (rows, 256) f32, features of 128 batch elements interleaved
    # on the lane axis (lane 2j = feature0, lane 2j+1 = feature1 of batch elem j).
    # First sigmoid, expressed as tanh; the affine 0.5*t+0.5 is folded into the
    # layer-1 weights/biases, so only the tanh(x/2) part is computed here.
    t = jnp.tanh(x_ref[...] * 0.5).astype(jnp.bfloat16)          # (rows, 256)

    # Fused de-interleave + Linear(2,2): one bf16 MXU dot against a sparse
    # (256, 256) matrix.  Columns [0:128) = hidden unit 0, [128:256) = unit 1,
    # both de-interleaved to batch-on-lanes order.
    h = jnp.dot(t, w_ref[...], preferred_element_type=jnp.float32)  # (rows, 256)

    h0 = jnp.maximum(h[:, :_LANES] + b1_0, 0.0)                   # ReLU hidden 0
    h1 = jnp.maximum(h[:, _LANES:] + b1_1, 0.0)                   # ReLU hidden 1

    # Linear(2,1) with pre-halved weights -> z == (layer-2 pre-activation)/2,
    # so the final sigmoid is a single tanh plus one mul+add.
    z = h0 * v0 + h1 * v1 + c0
    o_ref[...] = jnp.tanh(z) * 0.5 + 0.5                          # (rows, 128)


def _pack_layer1(w1):
    """(2,2) layer-1 weights -> sparse (256,256) bf16 de-interleave+matmul matrix.

    W[2j,   j      ] = 0.5*w1[0,0];  W[2j+1, j      ] = 0.5*w1[1,0]
    W[2j,   128 + j] = 0.5*w1[0,1];  W[2j+1, 128 + j] = 0.5*w1[1,1]
    (The 0.5 folds the sigmoid's 0.5*tanh(.)+0.5 scale into the linear layer.)
    """
    half = 0.5 * w1.astype(jnp.float32)
    idx = jnp.arange(_LANES)
    w = jnp.zeros((2 * _LANES, 2 * _LANES), jnp.float32)
    w = w.at[2 * idx, idx].set(half[0, 0])
    w = w.at[2 * idx + 1, idx].set(half[1, 0])
    w = w.at[2 * idx, idx + _LANES].set(half[0, 1])
    w = w.at[2 * idx + 1, idx + _LANES].set(half[1, 1])
    return w.astype(jnp.bfloat16)


def my_simple_nn_forward(x, w1, b1, w2, b2, *, max_rows_per_block=2048):
    """x: (N, 2) f32. w1: (2,2) in (in,out) layout. b1: (2,). w2: (2,1). b2: (1,).
    Returns (N, 1) f32."""
    n = x.shape[0]
    x = x.astype(jnp.float32)

    r = pl.cdiv(n, _LANES)                       # row-tiles of 128 batch elements
    n128 = r * _LANES
    if n128 != n:                                # pad pass only for ragged N
        x = jnp.pad(x, ((0, n128 - n), (0, 0)))
    x2 = x.reshape(r, 2 * _LANES)                # free row-major view, interleaved

    # Balanced row tiles, multiple of 8; force >= 2 grid steps when there is
    # enough work so v7x shards the parallel batch axis across both TensorCores.
    nblk = max(1, pl.cdiv(r, max_rows_per_block))
    if nblk == 1 and r >= 16:
        nblk = 2
    rows_block = 8 * pl.cdiv(pl.cdiv(r, nblk), 8)
    grid = (pl.cdiv(r, rows_block),)             # ragged last block is masked

    wbig = _pack_layer1(w1)                                          # (256, 256) bf16
    w1f = w1.astype(jnp.float32)
    b1_eff = b1.astype(jnp.float32) + 0.5 * (w1f[0, :] + w1f[1, :])  # fold 0.5*tanh+0.5
    params = jnp.concatenate(
        [b1_eff, 0.5 * w2.reshape(-1), 0.5 * b2.reshape(-1)]
    ).astype(jnp.float32)                                            # (5,)

    y = pl.pallas_call(
        mlp_kernel,
        out_shape=jax.ShapeDtypeStruct((r, _LANES), jnp.float32),
        grid=grid,
        in_specs=[
            pl.BlockSpec(memory_space=pltpu.MemorySpace.SMEM),        # scalars
            pl.BlockSpec((rows_block, 2 * _LANES), lambda i: (i, 0)),  # x tiles
            pl.BlockSpec((2 * _LANES, 2 * _LANES), lambda i: (0, 0)),  # resident W
        ],
        out_specs=pl.BlockSpec((rows_block, _LANES), lambda i: (i, 0)),
        compiler_params=pltpu.CompilerParams(
            dimension_semantics=("parallel",),       # shard batch tiles across TCs
            vmem_limit_bytes=40 * 1024 * 1024,
        ),
    )(params, x2, wbig)

    out = y.reshape(n128, 1)                     # free reshape, batch order preserved
    return out if n128 == n else out[:n]         # slice copy only for ragged N


def reference_forward(x, w1, b1, w2, b2):
    h = jax.nn.sigmoid(x)
    h = jnp.maximum(h @ w1 + b1, 0.0)
    return jax.nn.sigmoid(h @ w2 + b2)


if __name__ == "__main__":
    key = jax.random.PRNGKey(0)
    k_x, k_w1, k_b1, k_w2, k_b2 = jax.random.split(key, 5)

    # Deterministic init (mimics torch.nn.Linear uniform(-1/sqrt(in), 1/sqrt(in))).
    # Weights stored as (in, out), i.e. pre-transposed relative to torch's (out, in).
    lim = 1.0 / jnp.sqrt(2.0)
    w1 = jax.random.uniform(k_w1, (2, 2), jnp.float32, -lim, lim)
    b1 = jax.random.uniform(k_b1, (2,), jnp.float32, -lim, lim)
    w2 = jax.random.uniform(k_w2, (2, 1), jnp.float32, -lim, lim)
    b2 = jax.random.uniform(k_b2, (1,), jnp.float32, -lim, lim)

    # batch=8: single ragged block; 300: N%128!=0 pad/slice path; 2176: zero-copy
    # path with a 2-step grid and a masked last block.
    for batch in (8, 300, 2176):
        x = jax.random.normal(jax.random.fold_in(k_x, batch), (batch, 2), jnp.float32)

        y = jax.block_until_ready(my_simple_nn_forward(x, w1, b1, w2, b2))
        y_ref = reference_forward(x, w1, b1, w2, b2)

        assert y.shape == (batch, 1), y.shape
        # bf16 is used only for the (de-interleave + Linear(2,2)) MXU dot; the
        # resulting output error is well under 5e-3.
        err = float(jnp.max(jnp.abs(y - y_ref)))
        assert jnp.allclose(y, y_ref, atol=5e-3, rtol=5e-3), err

    print("KERNEL_OK")
</pallas_src>

<mosaic_0001>
module attributes {stable_mosaic.version = 11 : i64} {
  func.func @mlp_kernel(%arg0: i32, %arg1: memref<5xf32, #tpu.memory_space<smem>>, %arg2: memref<8x256xf32, #tpu.memory_space<vmem>>, %arg3: memref<256x256xbf16, #tpu.memory_space<vmem>>, %arg4: memref<8x128xf32, #tpu.memory_space<vmem>>) attributes {dimension_semantics = [#tpu.dimension_semantics<parallel>], iteration_bounds = array<i64: 1>, scalar_prefetch = 0 : i64, scratch_operands = 0 : i64, tpu.core_type = #tpu.core_type<tc>, window_params = [{transform_indices = @transform_0, window_bounds = array<i64: 5>}, {transform_indices = @transform_1, window_bounds = array<i64: 8, 256>}, {pipeline_mode = #tpu.pipeline_mode<synchronous>, transform_indices = @transform_2, window_bounds = array<i64: 256, 256>}, {transform_indices = @transform_3, window_bounds = array<i64: 8, 128>}]} {
    %c0 = arith.constant 0 : index
    %0 = memref.load %arg1[%c0] : memref<5xf32, #tpu.memory_space<smem>>
    %c1 = arith.constant 1 : index
    %1 = memref.load %arg1[%c1] : memref<5xf32, #tpu.memory_space<smem>>
    %c2 = arith.constant 2 : index
    %2 = memref.load %arg1[%c2] : memref<5xf32, #tpu.memory_space<smem>>
    %c3 = arith.constant 3 : index
    %3 = memref.load %arg1[%c3] : memref<5xf32, #tpu.memory_space<smem>>
    %c4 = arith.constant 4 : index
    %4 = memref.load %arg1[%c4] : memref<5xf32, #tpu.memory_space<smem>>
    %c0_0 = arith.constant 0 : index
    %c0_1 = arith.constant 0 : index
    %5 = vector.load %arg2[%c0_0, %c0_1] : memref<8x256xf32, #tpu.memory_space<vmem>>, vector<8x256xf32>
    %cst = arith.constant 5.000000e-01 : f32
    %6 = vector.broadcast %cst : f32 to vector<8x256xf32>
    %7 = arith.mulf %5, %6 : vector<8x256xf32>
    %8 = math.tanh %7 : vector<8x256xf32>
    %9 = arith.truncf %8 : vector<8x256xf32> to vector<8x256xbf16>
    %c0_2 = arith.constant 0 : index
    %c0_3 = arith.constant 0 : index
    %10 = vector.load %arg3[%c0_2, %c0_3] : memref<256x256xbf16, #tpu.memory_space<vmem>>, vector<256x256xbf16>
    %cst_4 = arith.constant dense<0.000000e+00> : vector<8x256xf32>
    %11 = tpu.matmul %9, %10, %cst_4 {dimension_numbers = #tpu.dot_dimension_numbers<[1], [0], [0], [1], [0, 0, 1, 1], [], []>} : vector<8x256xbf16>, vector<256x256xbf16>, vector<8x256xf32> -> vector<8x256xf32>
    %12 = vector.extract_strided_slice %11 {offsets = [0, 0], sizes = [8, 128], strides = [1, 1]} : vector<8x256xf32> to vector<8x128xf32>
    %13 = vector.broadcast %0 : f32 to vector<8x128xf32>
    %14 = arith.addf %12, %13 : vector<8x128xf32>
    %cst_5 = arith.constant 0.000000e+00 : f32
    %15 = vector.broadcast %cst_5 : f32 to vector<8x128xf32>
    %16 = arith.maximumf %14, %15 : vector<8x128xf32>
    %17 = vector.extract_strided_slice %11 {offsets = [0, 128], sizes = [8, 128], strides = [1, 1]} : vector<8x256xf32> to vector<8x128xf32>
    %18 = vector.broadcast %1 : f32 to vector<8x128xf32>
    %19 = arith.addf %17, %18 : vector<8x128xf32>
    %cst_6 = arith.constant 0.000000e+00 : f32
    %20 = vector.broadcast %cst_6 : f32 to vector<8x128xf32>
    %21 = arith.maximumf %19, %20 : vector<8x128xf32>
    %22 = vector.broadcast %2 : f32 to vector<8x128xf32>
    %23 = arith.mulf %16, %22 : vector<8x128xf32>
    %24 = vector.broadcast %3 : f32 to vector<8x128xf32>
    %25 = arith.mulf %21, %24 : vector<8x128xf32>
    %26 = arith.addf %23, %25 : vector<8x128xf32>
    %27 = vector.broadcast %4 : f32 to vector<8x128xf32>
    %28 = arith.addf %26, %27 : vector<8x128xf32>
    %29 = math.tanh %28 : vector<8x128xf32>
    %cst_7 = arith.constant 5.000000e-01 : f32
    %30 = vector.broadcast %cst_7 : f32 to vector<8x128xf32>
    %31 = arith.mulf %29, %30 : vector<8x128xf32>
    %cst_8 = arith.constant 5.000000e-01 : f32
    %32 = vector.broadcast %cst_8 : f32 to vector<8x128xf32>
    %33 = arith.addf %31, %32 : vector<8x128xf32>
    %c0_9 = arith.constant 0 : index
    %c0_10 = arith.constant 0 : index
    %34 = vector.load %arg4[%c0_9, %c0_10] : memref<8x128xf32, #tpu.memory_space<vmem>>, vector<8x128xf32>
    tpu.vector_store %arg4[%c0_9, %c0_10], %33 {strides = array<i32>} : memref<8x128xf32, #tpu.memory_space<vmem>>, vector<8x128xf32>,
    return
  }
  func.func @transform_0(%arg0: i32) -> i32 {
    %c0_i32 = arith.constant 0 : i32
    %c0_i32_0 = arith.constant 0 : i32
    return %c0_i32 : i32
  }
  func.func @transform_1(%arg0: i32) -> (i32, i32) {
    %c0_i32 = arith.constant 0 : i32
    %c0_i32_0 = arith.constant 0 : i32
    return %arg0, %c0_i32 : i32, i32
  }
  func.func @transform_2(%arg0: i32) -> (i32, i32) {
    %c0_i32 = arith.constant 0 : i32
    %c0_i32_0 = arith.constant 0 : i32
    %c0_i32_1 = arith.constant 0 : i32
    return %c0_i32, %c0_i32_0 : i32, i32
  }
  func.func @transform_3(%arg0: i32) -> (i32, i32) {
    %c0_i32 = arith.constant 0 : i32
    %c0_i32_0 = arith.constant 0 : i32
    return %arg0, %c0_i32 : i32, i32
  }
}

</mosaic_0001>

<llo_original>
// kernel: tpu_custom_call.1
$region0: #{tpu_custom_call.1}
  #allocation0 [shape = 'u32[]', space=smem, size = 0x4, offset = 0x4, fixed_abs, tag = 'smem constant byte address 0x4 - core index']
  #allocation1 [shape = 'u32[144,128]{1,0:T(1,128)}', space=vmem, size = 0x12000, scoped, tag = 'internal scratch']
  %s0 = inlined_call_operand.hbm [shape: f32[5], index: 0, kind: input, shape index: {}]
  %s1 = inlined_call_operand.vmem [shape: f32[1,256], index: 1, kind: input, shape index: {}]
  %s2 = inlined_call_operand.hbm [shape: bf16[256,256], index: 2, kind: input, shape index: {}]
  %s3 = inlined_call_operand.hbm [shape: f32[1,128], index: 3, kind: output, shape index: {}]
  %s4 = sld [smem:[#allocation0]]
  $region30: #{tpu_custom_call.1} parent=0
    _
  %s6 = ssub.s32 1, %s4
  %s7 = scalar_select 0, %s6, %s4
  $region1: #{tpu_custom_call.1} parent=0
    #allocation2 [shape = 'u8[512]{0}', space=smem, size = 0x200, scoped, tag = 'input window, operand 0, single buffered']
    #allocation3 [shape = 's32[1]{0}', space=sflag, size = 0x4, scoped, tag = 'scoped memory for tpu_custom_call.1']
    #allocation4 [shape = 's32[1]{0}', space=sflag, size = 0x4, scoped, tag = 'scoped memory for tpu_custom_call.1']
    #allocation5 [shape = 's32[1]{0}', space=sflag, size = 0x4, scoped, tag = 'scoped memory for tpu_custom_call.1']
    #allocation6 [shape = 'u8[131072]{0}', space=vmem, size = 0x20000, scoped, tag = 'input window, operand 2, single buffered']
    #allocation7 [shape = 'u8[4096]{0}', space=vmem, size = 0x1000, scoped, tag = 'output window, operand 0, single buffered']
    %8 = vsyncpa [#allocation5], 0
    %9 = vsyncpa [#allocation3], 0
    %10 = vsyncpa [#allocation4], 0
    // Predicated region
    $region2: #{tpu_custom_call.1} parent=1 // pred_check
      _
    $region3: #{tpu_custom_call.1} parent=1 // pred_check_branch
      %12 = sbr.rel (0) target = $region5
    $region4: #{tpu_custom_call.1} parent=1 // pred_region
      %s14 = ssub.s32 16, 16
      %15 = vsyncadd [#allocation5], %s14
      %18 = dma.hbm_to_smem %s0, 16, [#allocation2], [#allocation5]
    $region5: #{tpu_custom_call.1} parent=1 // pred_fallthru
      _
    // Predicated region
    $region6: #{tpu_custom_call.1} parent=1 // pred_check
      _
    $region7: #{tpu_custom_call.1} parent=1 // pred_check_branch
      %20 = sbr.rel (0) target = $region9
    $region8: #{tpu_custom_call.1} parent=1 // pred_region
      _
    $region9: #{tpu_custom_call.1} parent=1 // pred_fallthru
      _
    // Predicated region
    $region10: #{tpu_custom_call.1} parent=1 // pred_check
      _
    $region11: #{tpu_custom_call.1} parent=1 // pred_check_branch
      %22 = sbr.rel (0) target = $region13
    $region12: #{tpu_custom_call.1} parent=1 // pred_region
      %s24 = ssub.s32 4096, 4096
      %25 = vsyncadd [#allocation3], %s24
      %s26 = sshll.u32 [#allocation6], 4
      %s27 = int_to_ptr.vmem [resolvable:$true] %s26
      %32 = dma.hbm_to_vmem [thread:$0]  %s2, 4096, %s27, [#allocation3], 128, 128, 8
    $region13: #{tpu_custom_call.1} parent=1 // pred_fallthru
      _
    // Predicated region
    $region14: #{tpu_custom_call.1} parent=1 // pred_check
      _
    $region15: #{tpu_custom_call.1} parent=1 // pred_check_branch
      %34 = sbr.rel (0) target = $region17
    $region16: #{tpu_custom_call.1} parent=1 // pred_region
      %35 = dma.done [#allocation5], 16
    $region17: #{tpu_custom_call.1} parent=1 // pred_fallthru
      _
    // Predicated region
    $region18: #{tpu_custom_call.1} parent=1 // pred_check
      _
    $region19: #{tpu_custom_call.1} parent=1 // pred_check_branch
      %37 = sbr.rel (0) target = $region21
    $region20: #{tpu_custom_call.1} parent=1 // pred_region
      %38 = dma.done [#allocation3], 4096
    $region21: #{tpu_custom_call.1} parent=1 // pred_fallthru
      _
    %39 = sfence
    %s40 = sld [smem:[#allocation2]]
    %s41 = sld [smem:[#allocation2 + $0x1]]
    %s42 = sld [smem:[#allocation2 + $0x2]]
    %s43 = sld [smem:[#allocation2 + $0x3]]
    %s44 = sld [smem:[#allocation2 + $0x4]]
    %v45 = vld [vmem:[%s1] sm:$0x3]
    %v46 = vld [vmem:[%s1 + $0x2] sm:$0x3]
    %v47 = vld [vmem:[%s1 + $0x4] sm:$0x3]
    %v48 = vld [vmem:[%s1 + $0x6] sm:$0x3]
    %v49 = vld [vmem:[%s1 + $0x8] sm:$0x3]
    %v50 = vld [vmem:[%s1 + $0xa] sm:$0x3]
    %v51 = vld [vmem:[%s1 + $0xc] sm:$0x3]
    %v52 = vld [vmem:[%s1 + $0xe] sm:$0x3]
    %v53 = vmul.f32 %v45, 0.5
    %v54 = vmul.f32 %v46, 0.5
    %v55 = vmul.f32 %v47, 0.5
    %v56 = vmul.f32 %v48, 0.5
    %v57 = vmul.f32 %v49, 0.5
    %v58 = vmul.f32 %v50, 0.5
    %v59 = vmul.f32 %v51, 0.5
    %v60 = vmul.f32 %v52, 0.5
    %v61 = vtanh.pop %v53
    %v62 = vtanh.pop %v54
    %v63 = vtanh.pop %v55
    %v64 = vtanh.pop %v56
    %v65 = vtanh.pop %v57
    %v66 = vtanh.pop %v58
    %v67 = vtanh.pop %v59
    %v68 = vtanh.pop %v60
    %v77 = vcombine.low %v61, %v62
    %v78 = vcombine.low %v63, %v64
    %v79 = vcombine.low %v65, %v66
    %v80 = vcombine.low %v67, %v68
    %v82 = vunpack.c.l.s4 1966171168
    %v83 = vunpack.c.0.s8 %v82
    %v84 = vlaneseq
    %v85 = vshrl.u32 %v84, 7
    %v86 = vsub.s32 %v83, %v85
    %v87 = vrot.slane %v77, %v86
    %v89 = vunpack.c.l.s4 1966171168
    %v90 = vunpack.c.0.s8 %v89
    %v91 = vlaneseq
    %v92 = vshrl.u32 %v91, 7
    %v93 = vsub.s32 %v90, %v92
    %v94 = vrot.slane %v78, %v93
    %v96 = vunpack.c.l.s4 1966171168
    %v97 = vunpack.c.0.s8 %v96
    %v98 = vlaneseq
    %v99 = vshrl.u32 %v98, 7
    %v100 = vsub.s32 %v97, %v99
    %v101 = vrot.slane %v79, %v100
    %v103 = vunpack.c.l.s4 1966171168
    %v104 = vunpack.c.0.s8 %v103
    %v105 = vlaneseq
    %v106 = vshrl.u32 %v105, 7
    %v107 = vsub.s32 %v104, %v106
    %v108 = vrot.slane %v80, %v107
    %v109 = vcombine.low %v87, %v94
    %v110 = vcombine.high %v87, %v94
    %v111 = vcombine.low %v101, %v108
    %v112 = vcombine.high %v101, %v108
    %v114 = vunpack.c.l.s4 1966171168
    %v115 = vunpack.c.0.s8 %v114
    %v116 = vlaneseq
    %v117 = vshrl.u32 %v116, 7
    %v118 = vsub.s32 %v115, %v117
    %v119 = vrot.slane %v109, %v118
    %v121 = vunpack.c.l.s4 1966171168
    %v122 = vunpack.c.0.s8 %v121
    %v123 = vlaneseq
    %v124 = vshrl.u32 %v123, 7
    %v125 = vsub.s32 %v122, %v124
    %v126 = vrot.slane %v110, %v125
    %v128 = vunpack.c.l.s4 1966171168
    %v129 = vunpack.c.0.s8 %v128
    %v130 = vlaneseq
    %v131 = vshrl.u32 %v130, 7
    %v132 = vsub.s32 %v129, %v131
    %v133 = vrot.slane %v111, %v132
    %v135 = vunpack.c.l.s4 1966171168
    %v136 = vunpack.c.0.s8 %v135
    %v137 = vlaneseq
    %v138 = vshrl.u32 %v137, 7
    %v139 = vsub.s32 %v136, %v138
    %v140 = vrot.slane %v112, %v139
    %v141 = vcombine.low %v119, %v133
    %v142 = vcombine.low %v126, %v140
    %v145 = vpack.c.bf16 %v141, %v141
    %v146 = vpack.c.bf16 %v142, %v142
    %v147 = vld [vmem:[#allocation6] sm:$0xff]
    %v148 = vld [vmem:[#allocation6 + $0x8] sm:$0xff]
    %v149 = vld [vmem:[#allocation6 + $0x10] sm:$0xff]
    %v150 = vld [vmem:[#allocation6 + $0x18] sm:$0xff]
    %v151 = vld [vmem:[#allocation6 + $0x20] sm:$0xff]
    %v152 = vld [vmem:[#allocation6 + $0x28] sm:$0xff]
    %v153 = vld [vmem:[#allocation6 + $0x30] sm:$0xff]
    %v154 = vld [vmem:[#allocation6 + $0x38] sm:$0xff]
    %v155 = vld [vmem:[#allocation6 + $0x40] sm:$0xff]
    %v156 = vld [vmem:[#allocation6 + $0x48] sm:$0xff]
    %v157 = vld [vmem:[#allocation6 + $0x50] sm:$0xff]
    %v158 = vld [vmem:[#allocation6 + $0x58] sm:$0xff]
    %v159 = vld [vmem:[#allocation6 + $0x60] sm:$0xff]
    %v160 = vld [vmem:[#allocation6 + $0x68] sm:$0xff]
    %v161 = vld [vmem:[#allocation6 + $0x70] sm:$0xff]
    %v162 = vld [vmem:[#allocation6 + $0x78] sm:$0xff]
    %v163 = vld [vmem:[#allocation6 + $0x80] sm:$0xff]
    %v164 = vld [vmem:[#allocation6 + $0x88] sm:$0xff]
    %v165 = vld [vmem:[#allocation6 + $0x90] sm:$0xff]
    %v166 = vld [vmem:[#allocation6 + $0x98] sm:$0xff]
    %v167 = vld [vmem:[#allocation6 + $0xa0] sm:$0xff]
    %v168 = vld [vmem:[#allocation6 + $0xa8] sm:$0xff]
    %v169 = vld [vmem:[#allocation6 + $0xb0] sm:$0xff]
    %v170 = vld [vmem:[#allocation6 + $0xb8] sm:$0xff]
    %v171 = vld [vmem:[#allocation6 + $0xc0] sm:$0xff]
    %v172 = vld [vmem:[#allocation6 + $0xc8] sm:$0xff]
    %v173 = vld [vmem:[#allocation6 + $0xd0] sm:$0xff]
    %v174 = vld [vmem:[#allocation6 + $0xd8] sm:$0xff]
    %v175 = vld [vmem:[#allocation6 + $0xe0] sm:$0xff]
    %v176 = vld [vmem:[#allocation6 + $0xe8] sm:$0xff]
    %v177 = vld [vmem:[#allocation6 + $0xf0] sm:$0xff]
    %v178 = vld [vmem:[#allocation6 + $0xf8] sm:$0xff]
    %v211 = vunpack.c.l.b16 %v147
    %v212 = vunpack.c.h.b16 %v147
    %v213 = vunpack.c.l.b16 %v148
    %v214 = vunpack.c.h.b16 %v148
    %v215 = vunpack.c.l.b16 %v149
    %v216 = vunpack.c.h.b16 %v149
    %v217 = vunpack.c.l.b16 %v150
    %v218 = vunpack.c.h.b16 %v150
    %v219 = vunpack.c.l.b16 %v151
    %v220 = vunpack.c.h.b16 %v151
    %v221 = vunpack.c.l.b16 %v152
    %v222 = vunpack.c.h.b16 %v152
    %v223 = vunpack.c.l.b16 %v153
    %v224 = vunpack.c.h.b16 %v153
    %v225 = vunpack.c.l.b16 %v154
    %v226 = vunpack.c.h.b16 %v154
    %v227 = vunpack.c.l.b16 %v155
    %v228 = vunpack.c.h.b16 %v155
    %v229 = vunpack.c.l.b16 %v156
    %v230 = vunpack.c.h.b16 %v156
    %v231 = vunpack.c.l.b16 %v157
    %v232 = vunpack.c.h.b16 %v157
    %v233 = vunpack.c.l.b16 %v158
    %v234 = vunpack.c.h.b16 %v158
    %v235 = vunpack.c.l.b16 %v159
    %v236 = vunpack.c.h.b16 %v159
    %v237 = vunpack.c.l.b16 %v160
    %v238 = vunpack.c.h.b16 %v160
    %v239 = vunpack.c.l.b16 %v161
    %v240 = vunpack.c.h.b16 %v161
    %v241 = vunpack.c.l.b16 %v162
    %v242 = vunpack.c.h.b16 %v162
    %v243 = vunpack.c.l.b16 %v163
    %v244 = vunpack.c.h.b16 %v163
    %v245 = vunpack.c.l.b16 %v164
    %v246 = vunpack.c.h.b16 %v164
    %v247 = vunpack.c.l.b16 %v165
    %v248 = vunpack.c.h.b16 %v165
    %v249 = vunpack.c.l.b16 %v166
    %v250 = vunpack.c.h.b16 %v166
    %v251 = vunpack.c.l.b16 %v167
    %v252 = vunpack.c.h.b16 %v167
    %v253 = vunpack.c.l.b16 %v168
    %v254 = vunpack.c.h.b16 %v168
    %v255 = vunpack.c.l.b16 %v169
    %v256 = vunpack.c.h.b16 %v169
    %v257 = vunpack.c.l.b16 %v170
    %v258 = vunpack.c.h.b16 %v170
    %v259 = vunpack.c.l.b16 %v171
    %v260 = vunpack.c.h.b16 %v171
    %v261 = vunpack.c.l.b16 %v172
    %v262 = vunpack.c.h.b16 %v172
    %v263 = vunpack.c.l.b16 %v173
    %v264 = vunpack.c.h.b16 %v173
    %v265 = vunpack.c.l.b16 %v174
    %v266 = vunpack.c.h.b16 %v174
    %v267 = vunpack.c.l.b16 %v175
    %v268 = vunpack.c.h.b16 %v175
    %v269 = vunpack.c.l.b16 %v176
    %v270 = vunpack.c.h.b16 %v176
    %v271 = vunpack.c.l.b16 %v177
    %v272 = vunpack.c.h.b16 %v177
    %v273 = vunpack.c.l.b16 %v178
    %v274 = vunpack.c.h.b16 %v178
    %v275 = vpack.c.b16 %v213, %v211
    %v276 = vpack.c.b16 %v214, %v212
    %v277 = vpack.c.b16 %v217, %v215
    %v278 = vpack.c.b16 %v218, %v216
    %v279 = vpack.c.b16 %v221, %v219
    %v280 = vpack.c.b16 %v222, %v220
    %v281 = vpack.c.b16 %v225, %v223
    %v282 = vpack.c.b16 %v226, %v224
    %v283 = vpack.c.b16 %v229, %v227
    %v284 = vpack.c.b16 %v230, %v228
    %v285 = vpack.c.b16 %v233, %v231
    %v286 = vpack.c.b16 %v234, %v232
    %v287 = vpack.c.b16 %v237, %v235
    %v288 = vpack.c.b16 %v238, %v236
    %v289 = vpack.c.b16 %v241, %v239
    %v290 = vpack.c.b16 %v242, %v240
    %v291 = vpack.c.b16 %v245, %v243
    %v292 = vpack.c.b16 %v246, %v244
    %v293 = vpack.c.b16 %v249, %v247
    %v294 = vpack.c.b16 %v250, %v248
    %v295 = vpack.c.b16 %v253, %v251
    %v296 = vpack.c.b16 %v254, %v252
    %v297 = vpack.c.b16 %v257, %v255
    %v298 = vpack.c.b16 %v258, %v256
    %v299 = vpack.c.b16 %v261, %v259
    %v300 = vpack.c.b16 %v262, %v260
    %v301 = vpack.c.b16 %v265, %v263
    %v302 = vpack.c.b16 %v266, %v264
    %v303 = vpack.c.b16 %v269, %v267
    %v304 = vpack.c.b16 %v270, %v268
    %v305 = vpack.c.b16 %v273, %v271
    %v306 = vpack.c.b16 %v274, %v272
    %339 = vmatprep.subr.bf16.mxu0 %v276
    %340 = vmatpush1.bf16.msra.mxu0 %v275
    %341 = vmatprep.subr.bf16.mxu0 %v278
    %342 = vmatpush1.bf16.msra.mxu0 %v277
    %343 = vmatprep.subr.bf16.mxu0 %v280
    %344 = vmatpush1.bf16.msra.mxu0 %v279
    %345 = vmatprep.subr.bf16.mxu0 %v282
    %346 = vmatpush1.bf16.msra.mxu0 %v281
    %347 = vmatprep.subr.bf16.mxu0 %v284
    %348 = vmatpush1.bf16.msra.mxu0 %v283
    %349 = vmatprep.subr.bf16.mxu0 %v286
    %350 = vmatpush1.bf16.msra.mxu0 %v285
    %351 = vmatprep.subr.bf16.mxu0 %v288
    %352 = vmatpush1.bf16.msra.mxu0 %v287
    %353 = vmatprep.subr.bf16.mxu0 %v290
    %354 = vmatpush1.bf16.msra.mxu0 %v289
    %355 = vmatprep.subr.bf16.mxu0 %v292
    %356 = vmatpush1.bf16.msra.mxu0 %v291
    %357 = vmatprep.subr.bf16.mxu0 %v294
    %358 = vmatpush1.bf16.msra.mxu0 %v293
    %359 = vmatprep.subr.bf16.mxu0 %v296
    %360 = vmatpush1.bf16.msra.mxu0 %v295
    %361 = vmatprep.subr.bf16.mxu0 %v298
    %362 = vmatpush1.bf16.msra.mxu0 %v297
    %363 = vmatprep.subr.bf16.mxu0 %v300
    %364 = vmatpush1.bf16.msra.mxu0 %v299
    %365 = vmatprep.subr.bf16.mxu0 %v302
    %366 = vmatpush1.bf16.msra.mxu0 %v301
    %367 = vmatprep.subr.bf16.mxu0 %v304
    %368 = vmatpush1.bf16.msra.mxu0 %v303
    %369 = vmatprep.subr.bf16.mxu0 %v306
    %370 = vmatpush1.bf16.msra.mxu0 %v305
    %371 = vmatprep.mubr.bf16.mxu0 %v146
    %372 = vmatmul.mubr.bf16.gmra.mrb[0].mxu0 %v145
    %v373 = vpop.f32.mrb[0].mxu0
    %v374 = vadd.f32 0.0, %v373
    %v375 = vpop.f32.mrb[0].mxu0
    %v376 = vadd.f32 0.0, %v375
    %v377 = vpop.f32.mrb[0].mxu0
    %v378 = vpop.f32.mrb[0].mxu0
    %379 = vdwg.mxu0
    %v380 = vstv %s40
    %v381 = vadd.f32 %v374, %v380
    %v382 = vmax.f32 %v381, 0.0
    %v383 = vstv %s41
    %v384 = vadd.f32 %v376, %v383
    %v385 = vmax.f32 %v384, 0.0
    %v386 = vstv %s42
    %v387 = vmul.f32 %v382, %v386
    %v388 = vstv %s43
    %v389 = vmul.f32 %v385, %v388
    %v390 = vadd.f32 %v387, %v389
    %v391 = vstv %s44
    %v392 = vadd.f32 %v390, %v391
    %v393 = vtanh.pop %v392
    %v394 = vmul.f32 %v393, 0.5
    %v395 = vadd.f32 %v394, 0.5
    %396 = vst [vmem:[#allocation7] sm:$0xff] %v395
    // Predicated region
    $region22: #{tpu_custom_call.1} parent=1 // pred_check
      _
    $region23: #{tpu_custom_call.1} parent=1 // pred_check_branch
      %398 = sbr.rel (0) target = $region25
    $region24: #{tpu_custom_call.1} parent=1 // pred_region
      %s400 = ssub.s32 128, 16
      %401 = vsyncadd [#allocation4], %s400
      %s402 = sshll.u32 [#allocation7], 4
      %s403 = int_to_ptr.vmem [resolvable:$true] %s402
      %408 = dma.vmem_to_hbm [thread:$0]  %s403, 16, %s3, [#allocation4], 16, 16, 1
    $region25: #{tpu_custom_call.1} parent=1 // pred_fallthru
      _
    // Predicated region
    $region26: #{tpu_custom_call.1} parent=1 // pred_check
      _
    $region27: #{tpu_custom_call.1} parent=1 // pred_check_branch
      %410 = sbr.rel (0) target = $region29
    $region28: #{tpu_custom_call.1} parent=1 // pred_region
      %411 = dma.done [#allocation4], 128
    $region29: #{tpu_custom_call.1} parent=1 // pred_fallthru
      _
    %412 = vsyncpa [#allocation3], 1
    %413 = vsyncpa [#allocation4], 1
    %414 = vsyncpa [#allocation5], 1

</llo_original>
